<compile_context>
chip_gen: v6e
topology: v6e:2x2x1
jax: 0.10.0
libtpu: 0.0.40
codegen_flags: <defaults>
</compile_context>

<pallas_src>
import math
import numpy as np
import jax
import jax.numpy as jnp
from jax.experimental import pallas as pl
from jax.experimental.pallas import tpu as pltpu


def make_interp_matrix(n_in: int, n_out: int) -> jnp.ndarray:
    """Linear-interpolation matrix (n_out, n_in) with align_corners=True."""
    if n_out == 1:
        src = jnp.zeros((1,), jnp.float32)
    else:
        src = jnp.arange(n_out, dtype=jnp.float32) * (n_in - 1) / (n_out - 1)
    i0 = jnp.clip(jnp.floor(src).astype(jnp.int32), 0, n_in - 1)
    i1 = jnp.minimum(i0 + 1, n_in - 1)
    frac = src - i0.astype(jnp.float32)
    return (jax.nn.one_hot(i0, n_in, dtype=jnp.float32) * (1.0 - frac)[:, None]
            + jax.nn.one_hot(i1, n_in, dtype=jnp.float32) * frac[:, None])


def _upblock_kernel(x_ref, v_ref, uh_ref, b_ref, o_ref):
    # x_ref : (1, H, Cin*W)       one image: rows = h, lanes = (ci, w)
    # v_ref : (Cin*W, f*Cout*WO)  width-interp + pad + width-taps + channel-mix
    # uh_ref: (f, HO, H)          height-interp (+ pad + shift) per conv row tap
    # b_ref : (1, Cout*WO)        bias tiled over output width
    # o_ref : (1, HO, Cout*WO)    one image of output: rows = ho, lanes = (co, wo)
    f_taps = uh_ref.shape[0]
    cw = o_ref.shape[2]                      # Cout * WO
    x = x_ref[0]                             # (H, Cin*W)

    # Width pass: one matmul, contraction over (ci, w).
    g = jnp.dot(x, v_ref[...], preferred_element_type=jnp.float32)  # (H, f*Cout*WO)

    # Height pass: per conv row tap, bilinear height interp and accumulate.
    # f is tiny (3) -> static unroll; slices are contiguous static lane slices.
    acc = jnp.dot(uh_ref[0], g[:, 0:cw], preferred_element_type=jnp.float32)
    for p in range(1, f_taps):
        acc = acc + jnp.dot(uh_ref[p], g[:, p * cw:(p + 1) * cw],
                            preferred_element_type=jnp.float32)

    o_ref[0] = acc + b_ref[...]


def make_upblock_forward(weight, bias, H, W, f=3, pad=1):
    """Build the (weight-folded) operators ONCE and return a jitted forward(x).

    weight: (Cout, Cin, f, f); bias: (Cout,). x passed to forward: (N, Cin, H, W).
    """
    Cout, Cin = int(weight.shape[0]), int(weight.shape[1])
    OH, OW = 2 * H, 2 * W                      # after bilinear upsample
    HO = OH + 2 * pad - f + 1                  # after conv (padding=pad)
    WO = OW + 2 * pad - f + 1

    # Bilinear (align_corners=True) interp operators with the conv zero padding
    # folded in as zero border rows.
    uh_pad = jnp.pad(make_interp_matrix(H, OH), ((pad, pad), (0, 0)))  # (OH+2p, H)
    uw_pad = jnp.pad(make_interp_matrix(W, OW), ((pad, pad), (0, 0)))  # (OW+2p, W)

    # Height tap operators: uh_taps[p][i, h] = UhPad[i + p, h]
    uh_taps = jnp.stack([uh_pad[p:p + HO, :] for p in range(f)], axis=0)
    uh_taps = uh_taps.astype(jnp.float32)                              # (f, HO, H)

    # Width tap operators, with the conv weights and channel mixing folded in:
    #   V[(ci, w), (p, co, j)] = sum_q W[co, ci, p, q] * UwPad[j + q, w]
    uw_taps = jnp.stack([uw_pad[q:q + WO, :] for q in range(f)], axis=0)  # (f,WO,W)
    v = jnp.einsum('ocpq,qjw->cwpoj', weight.astype(jnp.float32),
                   uw_taps.astype(jnp.float32))
    v = v.reshape(Cin * W, f * Cout * WO)

    # Bias tiled over the output width (lanes ordered (co, wo)).
    b_row = jnp.repeat(bias.astype(jnp.float32), WO)[None, :]   # (1, Cout*WO)

    @jax.jit
    def forward(x):
        N = x.shape[0]
        # (N, Cin, H, W) -> (N, H, Cin*W): rows = h, lanes = (ci, w). Host-side.
        x2 = x.astype(jnp.float32).transpose(0, 2, 1, 3).reshape(N, H, Cin * W)

        out = pl.pallas_call(
            _upblock_kernel,
            out_shape=jax.ShapeDtypeStruct((N, HO, Cout * WO), jnp.float32),
            grid=(N,),
            in_specs=[
                pl.BlockSpec((1, H, Cin * W), lambda n: (n, 0, 0)),
                pl.BlockSpec((Cin * W, f * Cout * WO), lambda n: (0, 0)),
                pl.BlockSpec((f, HO, H), lambda n: (0, 0, 0)),
                pl.BlockSpec((1, Cout * WO), lambda n: (0, 0)),
            ],
            out_specs=pl.BlockSpec((1, HO, Cout * WO), lambda n: (n, 0, 0)),
            compiler_params=pltpu.CompilerParams(
                dimension_semantics=("parallel",)),   # 2x TCs on v7x
        )(x2, v, uh_taps, b_row)

        # (N, HO, Cout*WO) -> NCHW in the wrapper (layout plumbing only).
        return out.reshape(N, HO, Cout, WO).transpose(0, 2, 1, 3)

    return forward


def reference_forward(x, weight, bias):
    """Pure-JAX reference: bilinear align_corners=True upsample + conv(pad=1)."""
    N, C, H, W = x.shape
    OH, OW = 2 * H, 2 * W
    src_h = jnp.arange(OH, dtype=jnp.float32) * (H - 1) / (OH - 1)
    h0 = jnp.floor(src_h).astype(jnp.int32)
    h1 = jnp.minimum(h0 + 1, H - 1)
    fh = src_h - h0.astype(jnp.float32)
    src_w = jnp.arange(OW, dtype=jnp.float32) * (W - 1) / (OW - 1)
    w0 = jnp.floor(src_w).astype(jnp.int32)
    w1 = jnp.minimum(w0 + 1, W - 1)
    fw = src_w - w0.astype(jnp.float32)
    xh = (x[:, :, h0, :] * (1.0 - fh)[None, None, :, None]
          + x[:, :, h1, :] * fh[None, None, :, None])
    up = (xh[:, :, :, w0] * (1.0 - fw)[None, None, None, :]
          + xh[:, :, :, w1] * fw[None, None, None, :])
    out = jax.lax.conv_general_dilated(
        up, weight, window_strides=(1, 1), padding=[(1, 1), (1, 1)],
        dimension_numbers=('NCHW', 'OIHW', 'NCHW'))
    return out + bias[None, :, None, None]


if __name__ == "__main__":
    # Small shapes consistent with the module: N=2, Cin=4, H=W=16, kernel f=3.
    N, Cin, H, W = 2, 4, 16, 16
    f = 3
    Cout = Cin // 2

    key = jax.random.PRNGKey(0)
    kx, kw, kb = jax.random.split(key, 3)
    x = jax.random.normal(kx, (N, Cin, H, W), dtype=jnp.float32)

    # weights_init: N(0, sqrt(2 / (f*f*Cout))).
    std = math.sqrt(2.0 / (f * f * Cout))
    weight = jax.random.normal(kw, (Cout, Cin, f, f), dtype=jnp.float32) * std
    # Conv2d default bias init (uniform in +-1/sqrt(fan_in)), deterministic here.
    bound = 1.0 / math.sqrt(Cin * f * f)
    bias = jax.random.uniform(kb, (Cout,), minval=-bound, maxval=bound,
                              dtype=jnp.float32)

    # Operator construction is hoisted: done once here ("weight load" time).
    upblock = make_upblock_forward(weight, bias, H, W, f=f, pad=1)

    out = upblock(x)
    out = jax.block_until_ready(out)

    ref = reference_forward(x, weight, bias)
    assert out.shape == (N, Cout, 2 * H, 2 * W), out.shape
    np.testing.assert_allclose(np.asarray(out), np.asarray(ref),
                               rtol=1e-4, atol=1e-4)
    print("KERNEL_OK")
</pallas_src>

<mosaic_0001>
module attributes {stable_mosaic.version = 11 : i64} {
  func.func @_upblock_kernel(%arg0: i32, %arg1: memref<1x16x64xf32, #tpu.memory_space<vmem>>, %arg2: memref<64x192xf32, #tpu.memory_space<vmem>>, %arg3: memref<3x32x16xf32, #tpu.memory_space<vmem>>, %arg4: memref<1x64xf32, #tpu.memory_space<vmem>>, %arg5: memref<1x32x64xf32, #tpu.memory_space<vmem>>) attributes {dimension_semantics = [#tpu.dimension_semantics<parallel>], iteration_bounds = array<i64: 2>, scalar_prefetch = 0 : i64, scratch_operands = 0 : i64, tpu.core_type = #tpu.core_type<tc>, window_params = [{transform_indices = @transform_0, window_bounds = array<i64: 1, 16, 64>}, {pipeline_mode = #tpu.pipeline_mode<synchronous>, transform_indices = @transform_1, window_bounds = array<i64: 64, 192>}, {pipeline_mode = #tpu.pipeline_mode<synchronous>, transform_indices = @transform_2, window_bounds = array<i64: 3, 32, 16>}, {pipeline_mode = #tpu.pipeline_mode<synchronous>, transform_indices = @transform_3, window_bounds = array<i64: 1, 64>}, {transform_indices = @transform_4, window_bounds = array<i64: 1, 32, 64>}]} {
    %c0 = arith.constant 0 : index
    %c0_0 = arith.constant 0 : index
    %c0_1 = arith.constant 0 : index
    %0 = vector.load %arg1[%c0, %c0_0, %c0_1] : memref<1x16x64xf32, #tpu.memory_space<vmem>>, vector<1x16x64xf32>
    %1 = vector.shape_cast %0 : vector<1x16x64xf32> to vector<16x64xf32>
    %c0_2 = arith.constant 0 : index
    %c0_3 = arith.constant 0 : index
    %2 = vector.load %arg2[%c0_2, %c0_3] : memref<64x192xf32, #tpu.memory_space<vmem>>, vector<64x192xf32>
    %cst = arith.constant dense<0.000000e+00> : vector<16x192xf32>
    %3 = tpu.matmul %1, %2, %cst {dimension_numbers = #tpu.dot_dimension_numbers<[1], [0], [0], [1], [0, 0, 1, 1], [], []>} : vector<16x64xf32>, vector<64x192xf32>, vector<16x192xf32> -> vector<16x192xf32>
    %c0_4 = arith.constant 0 : index
    %c0_5 = arith.constant 0 : index
    %c0_6 = arith.constant 0 : index
    %4 = vector.load %arg3[%c0_4, %c0_5, %c0_6] : memref<3x32x16xf32, #tpu.memory_space<vmem>>, vector<1x32x16xf32>
    %5 = vector.shape_cast %4 : vector<1x32x16xf32> to vector<32x16xf32>
    %6 = vector.extract_strided_slice %3 {offsets = [0, 0], sizes = [16, 64], strides = [1, 1]} : vector<16x192xf32> to vector<16x64xf32>
    %cst_7 = arith.constant dense<0.000000e+00> : vector<32x64xf32>
    %7 = tpu.matmul %5, %6, %cst_7 {dimension_numbers = #tpu.dot_dimension_numbers<[1], [0], [0], [1], [0, 0, 1, 1], [], []>} : vector<32x16xf32>, vector<16x64xf32>, vector<32x64xf32> -> vector<32x64xf32>
    %c1 = arith.constant 1 : index
    %c0_8 = arith.constant 0 : index
    %c0_9 = arith.constant 0 : index
    %8 = vector.load %arg3[%c1, %c0_8, %c0_9] : memref<3x32x16xf32, #tpu.memory_space<vmem>>, vector<1x32x16xf32>
    %9 = vector.shape_cast %8 : vector<1x32x16xf32> to vector<32x16xf32>
    %10 = vector.extract_strided_slice %3 {offsets = [0, 64], sizes = [16, 64], strides = [1, 1]} : vector<16x192xf32> to vector<16x64xf32>
    %cst_10 = arith.constant dense<0.000000e+00> : vector<32x64xf32>
    %11 = tpu.matmul %9, %10, %cst_10 {dimension_numbers = #tpu.dot_dimension_numbers<[1], [0], [0], [1], [0, 0, 1, 1], [], []>} : vector<32x16xf32>, vector<16x64xf32>, vector<32x64xf32> -> vector<32x64xf32>
    %12 = arith.addf %7, %11 : vector<32x64xf32>
    %c2 = arith.constant 2 : index
    %c0_11 = arith.constant 0 : index
    %c0_12 = arith.constant 0 : index
    %13 = vector.load %arg3[%c2, %c0_11, %c0_12] : memref<3x32x16xf32, #tpu.memory_space<vmem>>, vector<1x32x16xf32>
    %14 = vector.shape_cast %13 : vector<1x32x16xf32> to vector<32x16xf32>
    %15 = vector.extract_strided_slice %3 {offsets = [0, 128], sizes = [16, 64], strides = [1, 1]} : vector<16x192xf32> to vector<16x64xf32>
    %cst_13 = arith.constant dense<0.000000e+00> : vector<32x64xf32>
    %16 = tpu.matmul %14, %15, %cst_13 {dimension_numbers = #tpu.dot_dimension_numbers<[1], [0], [0], [1], [0, 0, 1, 1], [], []>} : vector<32x16xf32>, vector<16x64xf32>, vector<32x64xf32> -> vector<32x64xf32>
    %17 = arith.addf %12, %16 : vector<32x64xf32>
    %c0_14 = arith.constant 0 : index
    %c0_15 = arith.constant 0 : index
    %18 = vector.load %arg4[%c0_14, %c0_15] : memref<1x64xf32, #tpu.memory_space<vmem>>, vector<1x64xf32>
    %19 = vector.broadcast %18 : vector<1x64xf32> to vector<32x64xf32>
    %20 = arith.addf %17, %19 : vector<32x64xf32>
    %c0_16 = arith.constant 0 : index
    %c0_17 = arith.constant 0 : index
    %c0_18 = arith.constant 0 : index
    %21 = vector.load %arg5[%c0_16, %c0_17, %c0_18] : memref<1x32x64xf32, #tpu.memory_space<vmem>>, vector<1x32x64xf32>
    %22 = vector.shape_cast %21 : vector<1x32x64xf32> to vector<32x64xf32>
    %23 = vector.shape_cast %20 : vector<32x64xf32> to vector<1x32x64xf32>
    tpu.vector_store %arg5[%c0_16, %c0_17, %c0_18], %23 {strides = array<i32>} : memref<1x32x64xf32, #tpu.memory_space<vmem>>, vector<1x32x64xf32>,
    return
  }
  func.func @transform_0(%arg0: i32) -> (i32, i32, i32) {
    %c0_i32 = arith.constant 0 : i32
    %c0_i32_0 = arith.constant 0 : i32
    %c0_i32_1 = arith.constant 0 : i32
    return %arg0, %c0_i32, %c0_i32_0 : i32, i32, i32
  }
  func.func @transform_1(%arg0: i32) -> (i32, i32) {
    %c0_i32 = arith.constant 0 : i32
    %c0_i32_0 = arith.constant 0 : i32
    %c0_i32_1 = arith.constant 0 : i32
    return %c0_i32, %c0_i32_0 : i32, i32
  }
  func.func @transform_2(%arg0: i32) -> (i32, i32, i32) {
    %c0_i32 = arith.constant 0 : i32
    %c0_i32_0 = arith.constant 0 : i32
    %c0_i32_1 = arith.constant 0 : i32
    %c0_i32_2 = arith.constant 0 : i32
    return %c0_i32, %c0_i32_0, %c0_i32_1 : i32, i32, i32
  }
  func.func @transform_3(%arg0: i32) -> (i32, i32) {
    %c0_i32 = arith.constant 0 : i32
    %c0_i32_0 = arith.constant 0 : i32
    %c0_i32_1 = arith.constant 0 : i32
    return %c0_i32, %c0_i32_0 : i32, i32
  }
  func.func @transform_4(%arg0: i32) -> (i32, i32, i32) {
    %c0_i32 = arith.constant 0 : i32
    %c0_i32_0 = arith.constant 0 : i32
    %c0_i32_1 = arith.constant 0 : i32
    return %arg0, %c0_i32, %c0_i32_0 : i32, i32, i32
  }
}

</mosaic_0001>

<llo_original>
// kernel: forward.1
$region0: #{forward.1}
  #allocation0 [shape = 'u32[]', space=smem, size = 0x4, offset = 0x4, fixed_abs, tag = 'smem constant byte address 0x4 - core index']
  #allocation1 [shape = 'u32[144,128]{1,0:T(1,128)}', space=vmem, size = 0x12000, scoped, tag = 'internal scratch']
  %s0 = inlined_call_operand.vmem [shape: f32[2,16,64], index: 0, kind: input, shape index: {}]
  %s1 = inlined_call_operand.vmem [shape: f32[64,192], index: 1, kind: input, shape index: {}]
  %s2 = inlined_call_operand.vmem [shape: f32[3,32,16], index: 2, kind: input, shape index: {}]
  %s3 = inlined_call_operand.vmem [shape: f32[1,64], index: 3, kind: input, shape index: {}]
  %s4 = inlined_call_operand.vmem [shape: f32[2,32,64], index: 4, kind: output, shape index: {}]
  %s5 = sld [smem:[#allocation0]]
  $region49: #{forward.1} parent=0
    _
  %s7 = ssub.s32 1, %s5
  %s8 = scalar_select 0, %s7, %s5
  loop: start=0, step=1, limit=4
  $region2: #{forward.1} parent=0 // loop_pre_header
    _
  $region3: #{forward.1} parent=0 // loop_header
    %s10 = sphi 0, %s14
    %p11 = scmp.ge.s32.totalorder %s10, 4
    %s20 = sphi 0, %s22
    %s23 = sphi 0, %s20
    %s24 = sphi 0, %s23
    %s40 = sphi 0, %s24
    %s44 = sphi 0, %s44
    %s46 = sphi 0, %s44
    %s47 = sphi 0, %s46
    %s61 = sphi 0, %s47
    %s65 = sphi 0, %s65
    %s67 = sphi 0, %s65
    %s68 = sphi 0, %s67
    %s82 = sphi 0, %s68
    %s86 = sphi 0, %s86
    %s88 = sphi 0, %s86
    %s89 = sphi 0, %s88
    %s103 = sphi 0, %s89
    %s109 = sphi 0, %s111
    %s112 = sphi 0, %s109
    %s113 = sphi 0, %s112
    %s129 = sphi 0, %s113
  $region4: #{forward.1} parent=0 // loop_header_branch
    %13 = sbr.rel (%p11) target = $region8
  $region5: #{forward.1} parent=0 // loop_body
    %s15 = ssub.s32 %s10, 1
    %s16 = ssub.s32 %s10, 2
    %s17 = sadd.s32 %s10, 1
    %s18 = ssub.s32 %s10, %s17
    %p19 = scmp.eq.s32.totalorder %s18, 0
    %s21 = sadd.s32 %s20, 1
    %s22 = scalar_select %p19, %s20, %s21
    %p25 = pneg %p19
    %p26 = scmp.eq.s32.totalorder %s10, 1
    %p27 = por %p25, %p26
    %p28 = scmp.ne.s32.totalorder %s20, %s23
    %p29 = scmp.eq.s32.totalorder %s10, 0
    %p30 = por %p28, %p29
    %p31 = scmp.ne.s32.totalorder %s20, %s23
    %p32 = scmp.eq.s32.totalorder %s15, 1
    %p33 = por %p31, %p32
    %p34 = scmp.ne.s32.totalorder %s23, %s24
    %p35 = scmp.eq.s32.totalorder %s15, 0
    %p36 = por %p34, %p35
    %p37 = scmp.ne.s32.totalorder %s23, %s24
    %p38 = scmp.eq.s32.totalorder %s16, 1
    %p39 = por %p37, %p38
    %p41 = scmp.ne.s32.totalorder %s24, %s40
    %p42 = scmp.eq.s32.totalorder %s16, 0
    %p43 = por %p41, %p42
    %s45 = sadd.s32 %s44, 1
    %p48 = scmp.eq.s32.totalorder %s10, 1
    %p49 = scmp.ne.s32.totalorder %s44, %s46
    %p50 = scmp.eq.s32.totalorder %s10, 0
    %p51 = por %p49, %p50
    %p52 = scmp.ne.s32.totalorder %s44, %s46
    %p53 = scmp.eq.s32.totalorder %s15, 1
    %p54 = por %p52, %p53
    %p55 = scmp.ne.s32.totalorder %s46, %s47
    %p56 = scmp.eq.s32.totalorder %s15, 0
    %p57 = por %p55, %p56
    %p58 = scmp.ne.s32.totalorder %s46, %s47
    %p59 = scmp.eq.s32.totalorder %s16, 1
    %p60 = por %p58, %p59
    %p62 = scmp.ne.s32.totalorder %s47, %s61
    %p63 = scmp.eq.s32.totalorder %s16, 0
    %p64 = por %p62, %p63
    %s66 = sadd.s32 %s65, 1
    %p69 = scmp.eq.s32.totalorder %s10, 1
    %p70 = scmp.ne.s32.totalorder %s65, %s67
    %p71 = scmp.eq.s32.totalorder %s10, 0
    %p72 = por %p70, %p71
    %p73 = scmp.ne.s32.totalorder %s65, %s67
    %p74 = scmp.eq.s32.totalorder %s15, 1
    %p75 = por %p73, %p74
    %p76 = scmp.ne.s32.totalorder %s67, %s68
    %p77 = scmp.eq.s32.totalorder %s15, 0
    %p78 = por %p76, %p77
    %p79 = scmp.ne.s32.totalorder %s67, %s68
    %p80 = scmp.eq.s32.totalorder %s16, 1
    %p81 = por %p79, %p80
    %p83 = scmp.ne.s32.totalorder %s68, %s82
    %p84 = scmp.eq.s32.totalorder %s16, 0
    %p85 = por %p83, %p84
    %s87 = sadd.s32 %s86, 1
    %p90 = scmp.eq.s32.totalorder %s10, 1
    %p91 = scmp.ne.s32.totalorder %s86, %s88
    %p92 = scmp.eq.s32.totalorder %s10, 0
    %p93 = por %p91, %p92
    %p94 = scmp.ne.s32.totalorder %s86, %s88
    %p95 = scmp.eq.s32.totalorder %s15, 1
    %p96 = por %p94, %p95
    %p97 = scmp.ne.s32.totalorder %s88, %s89
    %p98 = scmp.eq.s32.totalorder %s15, 0
    %p99 = por %p97, %p98
    %p100 = scmp.ne.s32.totalorder %s88, %s89
    %p101 = scmp.eq.s32.totalorder %s16, 1
    %p102 = por %p100, %p101
    %p104 = scmp.ne.s32.totalorder %s89, %s103
    %p105 = scmp.eq.s32.totalorder %s16, 0
    %p106 = por %p104, %p105
    %s107 = ssub.s32 %s10, %s17
    %p108 = scmp.eq.s32.totalorder %s107, 0
    %s110 = sadd.s32 %s109, 1
    %s111 = scalar_select %p108, %s109, %s110
    %p114 = pneg %p108
    %p115 = scmp.eq.s32.totalorder %s10, 1
    %p116 = por %p114, %p115
    %p117 = scmp.ne.s32.totalorder %s109, %s112
    %p118 = scmp.eq.s32.totalorder %s10, 0
    %p119 = por %p117, %p118
    %p120 = scmp.ne.s32.totalorder %s109, %s112
    %p121 = scmp.eq.s32.totalorder %s15, 1
    %p122 = por %p120, %p121
    %p123 = scmp.ne.s32.totalorder %s112, %s113
    %p124 = scmp.eq.s32.totalorder %s15, 0
    %p125 = por %p123, %p124
    %p126 = scmp.ne.s32.totalorder %s112, %s113
    %p127 = scmp.eq.s32.totalorder %s16, 1
    %p128 = por %p126, %p127
    %p130 = scmp.ne.s32.totalorder %s113, %s129
    %p131 = scmp.eq.s32.totalorder %s16, 0
    %p132 = por %p130, %p131
    %p133 = scmp.le.s32.totalorder 1, %s10
    %p134 = scmp.lt.s32.totalorder %s10, 3
    %p135 = pnand %p133, %p134
    %p136 = pneg %p135
    // Predicated region
    $region9: #{forward.1} parent=5 // pred_check
      _
    $region10: #{forward.1} parent=5 // pred_check_branch
      %138 = sbr.rel (%p135) target = $region12
    $region11: #{forward.1} parent=5 // pred_region
      %s139 = ssub.s32 %s10, 1
      // Predicated region
      $region13: #{forward.1} parent=11 // pred_check
        %p140 = pneg %p57
      $region14: #{forward.1} parent=11 // pred_check_branch
        %142 = sbr.rel (%p140) target = $region16
      $region15: #{forward.1} parent=11 // pred_region
        _
      $region16: #{forward.1} parent=11 // pred_fallthru
        _
      // Predicated region
      $region17: #{forward.1} parent=11 // pred_check
        %p143 = pneg %p78
      $region18: #{forward.1} parent=11 // pred_check_branch
        %145 = sbr.rel (%p143) target = $region20
      $region19: #{forward.1} parent=11 // pred_region
        _
      $region20: #{forward.1} parent=11 // pred_fallthru
        _
      // Predicated region
      $region21: #{forward.1} parent=11 // pred_check
        %p146 = pneg %p99
      $region22: #{forward.1} parent=11 // pred_check_branch
        %148 = sbr.rel (%p146) target = $region24
      $region23: #{forward.1} parent=11 // pred_region
        _
      $region24: #{forward.1} parent=11 // pred_fallthru
        _
    $region12: #{forward.1} parent=5 // pred_fallthru
      _
    %p149 = scmp.lt.s32.totalorder %s10, 2
    // Predicated region
    $region25: #{forward.1} parent=5 // pred_check
      %p150 = pneg %p149
    $region26: #{forward.1} parent=5 // pred_check_branch
      %152 = sbr.rel (%p150) target = $region28
    $region27: #{forward.1} parent=5 // pred_region
      // Predicated region
      $region29: #{forward.1} parent=27 // pred_check
        %p153 = pneg %p30
      $region30: #{forward.1} parent=27 // pred_check_branch
        %155 = sbr.rel (%p153) target = $region32
      $region31: #{forward.1} parent=27 // pred_region
        %p156 = scmp.lt.s32.totalorder %s10, 1
        %s157 = scalar_select %p156, %s10, 1
        %s158 = smul.addr %s157, 2
        %s159 = smul.addr %s158, 8
        %s160 = scalar_lea.vmem %s0, %s159
      $region32: #{forward.1} parent=27 // pred_fallthru
        _
    $region28: #{forward.1} parent=5 // pred_fallthru
      _
    %p161 = scmp.le.s32.totalorder 1, %s10
    %p162 = scmp.lt.s32.totalorder %s10, 3
    %p163 = pnand %p161, %p162
    %p164 = pneg %p163
    // Predicated region
    $region33: #{forward.1} parent=5 // pred_check
      _
    $region34: #{forward.1} parent=5 // pred_check_branch
      %166 = sbr.rel (%p163) target = $region36
    $region35: #{forward.1} parent=5 // pred_region
      %s167 = ssub.s32 %s10, 1
      %p168 = scmp.lt.s32.totalorder %s15, 1
      %s169 = scalar_select %p168, %s15, 1
      %s170 = smul.addr %s169, 2
      %s171 = smul.addr %s170, 8
      %s172 = scalar_lea.vmem %s0, %s171
      %p173 = pneg %p36
      %p174 = pneg %p33
      %p175 = pneg %p57
      %p176 = pneg %p54
      %p177 = pneg %p78
      %p178 = pneg %p75
      %p179 = pneg %p99
      %p180 = pneg %p96
      %p181 = pneg %p125
      %p182 = pneg %p122
      %p183 = scmp.lt.s32.totalorder %s15, 1
      %s184 = scalar_select %p183, %s15, 1
      %s185 = smul.addr %s184, 4
      %s186 = smul.addr %s185, 8
      %s187 = scalar_lea.vmem %s4, %s186
      %p188 = scmp.lt.s32.totalorder %s15, 1
      %s189 = scalar_select %p188, %s15, 1
      %s190 = smul.addr %s189, 2
      %s191 = smul.addr %s190, 8
      %s192 = scalar_lea.vmem %s0, %s191
      %p193 = scmp.lt.s32.totalorder %s15, 1
      %s194 = scalar_select %p193, %s15, 1
      %s195 = smul.addr %s194, 4
      %s196 = smul.addr %s195, 8
      %s197 = scalar_lea.vmem %s4, %s196
      %v198 = vld [vmem:[%s192] sm:$0xff]
      %v199 = vld [vmem:[%s192 + $0x8] sm:$0xff]
      %v200 = vld [vmem:[%s1] sm:$0xff]
      %v201 = vld [vmem:[%s1 + $0x8] sm:$0xff]
      %v202 = vld [vmem:[%s1 + $0x10] sm:$0xff]
      %v203 = vld [vmem:[%s1 + $0x18] sm:$0xff]
      %v204 = vld [vmem:[%s1 + $0x20] sm:$0xff]
      %v205 = vld [vmem:[%s1 + $0x28] sm:$0xff]
      %v206 = vld [vmem:[%s1 + $0x30] sm:$0xff]
      %v207 = vld [vmem:[%s1 + $0x38] sm:$0xff]
      %v208 = vld [vmem:[%s1 + $0x40] sm:$0xff]
      %v209 = vld [vmem:[%s1 + $0x48] sm:$0xff]
      %v210 = vld [vmem:[%s1 + $0x50] sm:$0xff]
      %v211 = vld [vmem:[%s1 + $0x58] sm:$0xff]
      %v212 = vld [vmem:[%s1 + $0x60] sm:$0xff]
      %v213 = vld [vmem:[%s1 + $0x68] sm:$0xff]
      %v214 = vld [vmem:[%s1 + $0x70] sm:$0xff]
      %v215 = vld [vmem:[%s1 + $0x78] sm:$0xff]
      %vm216 = vcmask 523264
      %v218 = vsel %vm216, %v198, 0
      %v221 = vsel %vm216, %v199, 0
      %223 = vmatprep.subr.mxu0 0.0
      %224 = vmatpush1.msra.mxu0 0.0
      %225 = vmatprep.subr.mxu0 0.0
      %226 = vmatpush1.msra.mxu0 0.0
      %227 = vmatprep.subr.mxu0 0.0
      %228 = vmatpush1.msra.mxu0 0.0
      %229 = vmatprep.subr.mxu0 0.0
      %230 = vmatpush1.msra.mxu0 0.0
      %231 = vmatprep.subr.mxu0 0.0
      %232 = vmatpush1.msra.mxu0 0.0
      %233 = vmatprep.subr.mxu0 0.0
      %234 = vmatpush1.msra.mxu0 0.0
      %235 = vmatprep.subr.mxu0 0.0
      %236 = vmatpush1.msra.mxu0 0.0
      %237 = vmatprep.subr.mxu0 0.0
      %238 = vmatpush1.msra.mxu0 0.0
      %239 = vmatprep.subr.mxu0 %v215
      %240 = vmatpush1.msra.mxu0 %v214
      %241 = vmatprep.subr.mxu0 %v213
      %242 = vmatpush1.msra.mxu0 %v212
      %243 = vmatprep.subr.mxu0 %v211
      %244 = vmatpush1.msra.mxu0 %v210
      %245 = vmatprep.subr.mxu0 %v209
      %246 = vmatpush1.msra.mxu0 %v208
      %247 = vmatprep.subr.mxu0 %v207
      %248 = vmatpush1.msra.mxu0 %v206
      %249 = vmatprep.subr.mxu0 %v205
      %250 = vmatpush1.msra.mxu0 %v204
      %251 = vmatprep.subr.mxu0 %v203
      %252 = vmatpush1.msra.mxu0 %v202
      %253 = vmatprep.subr.mxu0 %v201
      %254 = vmatpush1.msra.mxu0 %v200
      %255 = vmatprep.subr.mxu0 0.0
      %256 = vmatpush2.msra.mxu0 0.0
      %257 = vmatprep.subr.mxu0 0.0
      %258 = vmatpush2.msra.mxu0 0.0
      %259 = vmatprep.subr.mxu0 0.0
      %260 = vmatpush2.msra.mxu0 0.0
      %261 = vmatprep.subr.mxu0 0.0
      %262 = vmatpush2.msra.mxu0 0.0
      %263 = vmatprep.subr.mxu0 0.0
      %264 = vmatpush2.msra.mxu0 0.0
      %265 = vmatprep.subr.mxu0 0.0
      %266 = vmatpush2.msra.mxu0 0.0
      %267 = vmatprep.subr.mxu0 0.0
      %268 = vmatpush2.msra.mxu0 0.0
      %269 = vmatprep.subr.mxu0 0.0
      %270 = vmatpush2.msra.mxu0 0.0
      %271 = vmatprep.subr.mxu0 0.0
      %272 = vmatpush2.msra.mxu0 0.0
      %273 = vmatprep.subr.mxu0 0.0
      %274 = vmatpush2.msra.mxu0 0.0
      %275 = vmatprep.subr.mxu0 0.0
      %276 = vmatpush2.msra.mxu0 0.0
      %277 = vmatprep.subr.mxu0 0.0
      %278 = vmatpush2.msra.mxu0 0.0
      %279 = vmatprep.subr.mxu0 0.0
      %280 = vmatpush2.msra.mxu0 0.0
      %281 = vmatprep.subr.mxu0 0.0
      %282 = vmatpush2.msra.mxu0 0.0
      %283 = vmatprep.subr.mxu0 0.0
      %284 = vmatpush2.msra.mxu0 0.0
      %285 = vmatprep.subr.mxu0 0.0
      %286 = vmatpush2.msra.mxu0 0.0
      %287 = vmatprep.mubr.f32.mxu0 0.0
      %288 = vmatmul.mubr.f32.gmra.mxu0 %v218
      %v289 = vpop.f32.mrf.mxu0
      %v290 = vadd.f32 0.0, %v289
      %v291 = vpop.f32.mrf.mxu0
      %v292 = vadd.f32 0.0, %v291
      %293 = vmatprep.mubr.f32.mxu0 0.0
      %294 = vmatmul.mubr.f32.gmra.mxu0 %v221
      %v295 = vpop.f32.mrf.mxu0
      %v296 = vadd.f32 0.0, %v295
      %v297 = vpop.f32.mrf.mxu0
      %v298 = vadd.f32 0.0, %v297
      %299 = vdwg.mxu0
      %v300 = vld [vmem:[%s2] sm:$0xff]
      %v301 = vld [vmem:[%s2 + $0x8] sm:$0xff]
      %v302 = vld [vmem:[%s2 + $0x10] sm:$0xff]
      %v303 = vld [vmem:[%s2 + $0x18] sm:$0xff]
      %s304 = scalar_lea.vmem %s2, 32
      %v305 = vld [vmem:[%s304] sm:$0xff]
      %v306 = vld [vmem:[%s304 + $0x8] sm:$0xff]
      %v307 = vld [vmem:[%s304 + $0x10] sm:$0xff]
      %v308 = vld [vmem:[%s304 + $0x18] sm:$0xff]
      %311 = vrot.lane.b32.xlu0 %v290, 64
      %v312 = vpop.permute.xlu0 %311
      %313 = vrot.lane.b32.xlu0 %v296, 64
      %v314 = vpop.permute.xlu0 %313
      %vm317 = vcmask 130048
      %v319 = vsel %vm317, %v305, 0
      %v322 = vsel %vm317, %v306, 0
      %v325 = vsel %vm317, %v307, 0
      %v328 = vsel %vm317, %v308, 0
      %330 = vmatprep.subr.mxu0 0.0
      %331 = vmatpush1.msra.mxu0 0.0
      %332 = vmatprep.subr.mxu0 0.0
      %333 = vmatpush1.msra.mxu0 0.0
      %334 = vmatprep.subr.mxu0 0.0
      %335 = vmatpush1.msra.mxu0 0.0
      %336 = vmatprep.subr.mxu0 0.0
      %337 = vmatpush1.msra.mxu0 0.0
      %338 = vmatprep.subr.mxu0 0.0
      %339 = vmatpush1.msra.mxu0 0.0
      %340 = vmatprep.subr.mxu0 0.0
      %341 = vmatpush1.msra.mxu0 0.0
      %342 = vmatprep.subr.mxu0 0.0
      %343 = vmatpush1.msra.mxu0 0.0
      %344 = vmatprep.subr.mxu0 0.0
      %345 = vmatpush1.msra.mxu0 0.0
      %346 = vmatprep.subr.mxu0 0.0
      %347 = vmatpush1.msra.mxu0 0.0
      %348 = vmatprep.subr.mxu0 0.0
      %349 = vmatpush1.msra.mxu0 0.0
      %350 = vmatprep.subr.mxu0 0.0
      %351 = vmatpush1.msra.mxu0 0.0
      %352 = vmatprep.subr.mxu0 0.0
      %353 = vmatpush1.msra.mxu0 0.0
      %354 = vmatprep.subr.mxu0 0.0
      %355 = vmatpush1.msra.mxu0 0.0
      %356 = vmatprep.subr.mxu0 0.0
      %357 = vmatpush1.msra.mxu0 0.0
      %358 = vmatprep.subr.mxu0 0.0
      %359 = vmatpush1.msra.mxu0 %v314
      %360 = vmatprep.subr.mxu0 0.0
      %361 = vmatpush1.msra.mxu0 %v312
      %362 = vmatprep.subr.mxu0 0.0
      %363 = vmatpush2.msra.mxu0 0.0
      %364 = vmatprep.subr.mxu0 0.0
      %365 = vmatpush2.msra.mxu0 0.0
      %366 = vmatprep.subr.mxu0 0.0
      %367 = vmatpush2.msra.mxu0 0.0
      %368 = vmatprep.subr.mxu0 0.0
      %369 = vmatpush2.msra.mxu0 0.0
      %370 = vmatprep.subr.mxu0 0.0
      %371 = vmatpush2.msra.mxu0 0.0
      %372 = vmatprep.subr.mxu0 0.0
      %373 = vmatpush2.msra.mxu0 0.0
      %374 = vmatprep.subr.mxu0 0.0
      %375 = vmatpush2.msra.mxu0 0.0
      %376 = vmatprep.subr.mxu0 0.0
      %377 = vmatpush2.msra.mxu0 0.0
      %378 = vmatprep.subr.mxu0 0.0
      %379 = vmatpush2.msra.mxu0 0.0
      %380 = vmatprep.subr.mxu0 0.0
      %381 = vmatpush2.msra.mxu0 0.0
      %382 = vmatprep.subr.mxu0 0.0
      %383 = vmatpush2.msra.mxu0 0.0
      %384 = vmatprep.subr.mxu0 0.0
      %385 = vmatpush2.msra.mxu0 0.0
      %386 = vmatprep.subr.mxu0 0.0
      %387 = vmatpush2.msra.mxu0 0.0
      %388 = vmatprep.subr.mxu0 0.0
      %389 = vmatpush2.msra.mxu0 0.0
      %390 = vmatprep.subr.mxu0 0.0
      %391 = vmatpush2.msra.mxu0 0.0
      %392 = vmatprep.subr.mxu0 0.0
      %393 = vmatpush2.msra.mxu0 0.0
      %394 = vmatprep.mubr.f32.mxu0 0.0
      %395 = vmatmul.mubr.f32.gmra.mxu0 %v319
      %v396 = vpop.f32.mrf.mxu0
      %v397 = vadd.f32 0.0, %v396
      %v398 = vpop.f32.mrf.mxu0
      %399 = vmatprep.mubr.f32.mxu0 0.0
      %400 = vmatmul.mubr.f32.gmra.mxu0 %v322
      %v401 = vpop.f32.mrf.mxu0
      %v402 = vadd.f32 0.0, %v401
      %v403 = vpop.f32.mrf.mxu0
      %404 = vmatprep.mubr.f32.mxu0 0.0
      %405 = vmatmul.mubr.f32.gmra.mxu0 %v325
      %v406 = vpop.f32.mrf.mxu0
      %v407 = vadd.f32 0.0, %v406
      %v408 = vpop.f32.mrf.mxu0
      %409 = vmatprep.mubr.f32.mxu0 0.0
      %410 = vmatmul.mubr.f32.gmra.mxu0 %v328
      %v411 = vpop.f32.mrf.mxu0
      %v412 = vadd.f32 0.0, %v411
      %v413 = vpop.f32.mrf.mxu0
      %414 = vdwg.mxu0
      %v416 = vsel %vm317, %v300, 0
      %v419 = vsel %vm317, %v301, 0
      %v422 = vsel %vm317, %v302, 0
      %v425 = vsel %vm317, %v303, 0
      %427 = vmatprep.subr.mxu0 0.0
      %428 = vmatpush1.msra.mxu0 0.0
      %429 = vmatprep.subr.mxu0 0.0
      %430 = vmatpush1.msra.mxu0 0.0
      %431 = vmatprep.subr.mxu0 0.0
      %432 = vmatpush1.msra.mxu0 0.0
      %433 = vmatprep.subr.mxu0 0.0
      %434 = vmatpush1.msra.mxu0 0.0
      %435 = vmatprep.subr.mxu0 0.0
      %436 = vmatpush1.msra.mxu0 0.0
      %437 = vmatprep.subr.mxu0 0.0
      %438 = vmatpush1.msra.mxu0 0.0
      %439 = vmatprep.subr.mxu0 0.0
      %440 = vmatpush1.msra.mxu0 0.0
      %441 = vmatprep.subr.mxu0 0.0
      %442 = vmatpush1.msra.mxu0 0.0
      %443 = vmatprep.subr.mxu0 0.0
      %444 = vmatpush1.msra.mxu0 0.0
      %445 = vmatprep.subr.mxu0 0.0
      %446 = vmatpush1.msra.mxu0 0.0
      %447 = vmatprep.subr.mxu0 0.0
      %448 = vmatpush1.msra.mxu0 0.0
      %449 = vmatprep.subr.mxu0 0.0
      %450 = vmatpush1.msra.mxu0 0.0
      %451 = vmatprep.subr.mxu0 0.0
      %452 = vmatpush1.msra.mxu0 0.0
      %453 = vmatprep.subr.mxu0 0.0
      %454 = vmatpush1.msra.mxu0 0.0
      %455 = vmatprep.subr.mxu0 0.0
      %456 = vmatpush1.msra.mxu0 %v296
      %457 = vmatprep.subr.mxu0 0.0
      %458 = vmatpush1.msra.mxu0 %v290
      %459 = vmatprep.subr.mxu0 0.0
      %460 = vmatpush2.msra.mxu0 0.0
      %461 = vmatprep.subr.mxu0 0.0
      %462 = vmatpush2.msra.mxu0 0.0
      %463 = vmatprep.subr.mxu0 0.0
      %464 = vmatpush2.msra.mxu0 0.0
      %465 = vmatprep.subr.mxu0 0.0
      %466 = vmatpush2.msra.mxu0 0.0
      %467 = vmatprep.subr.mxu0 0.0
      %468 = vmatpush2.msra.mxu0 0.0
      %469 = vmatprep.subr.mxu0 0.0
      %470 = vmatpush2.msra.mxu0 0.0
      %471 = vmatprep.subr.mxu0 0.0
      %472 = vmatpush2.msra.mxu0 0.0
      %473 = vmatprep.subr.mxu0 0.0
      %474 = vmatpush2.msra.mxu0 0.0
      %475 = vmatprep.subr.mxu0 0.0
      %476 = vmatpush2.msra.mxu0 0.0
      %477 = vmatprep.subr.mxu0 0.0
      %478 = vmatpush2.msra.mxu0 0.0
      %479 = vmatprep.subr.mxu0 0.0
      %480 = vmatpush2.msra.mxu0 0.0
      %481 = vmatprep.subr.mxu0 0.0
      %482 = vmatpush2.msra.mxu0 0.0
      %483 = vmatprep.subr.mxu0 0.0
      %484 = vmatpush2.msra.mxu0 0.0
      %485 = vmatprep.subr.mxu0 0.0
      %486 = vmatpush2.msra.mxu0 0.0
      %487 = vmatprep.subr.mxu0 0.0
      %488 = vmatpush2.msra.mxu0 0.0
      %489 = vmatprep.subr.mxu0 0.0
      %490 = vmatpush2.msra.mxu0 0.0
      %491 = vmatprep.mubr.f32.mxu0 0.0
      %492 = vmatmul.mubr.f32.gmra.mxu0 %v416
      %v493 = vpop.f32.mrf.mxu0
      %v494 = vadd.f32 %v397, %v493
      %v495 = vpop.f32.mrf.mxu0
      %496 = vmatprep.mubr.f32.mxu0 0.0
      %497 = vmatmul.mubr.f32.gmra.mxu0 %v419
      %v498 = vpop.f32.mrf.mxu0
      %v499 = vadd.f32 %v402, %v498
      %v500 = vpop.f32.mrf.mxu0
      %501 = vmatprep.mubr.f32.mxu0 0.0
      %502 = vmatmul.mubr.f32.gmra.mxu0 %v422
      %v503 = vpop.f32.mrf.mxu0
      %v504 = vadd.f32 %v407, %v503
      %v505 = vpop.f32.mrf.mxu0
      %506 = vmatprep.mubr.f32.mxu0 0.0
      %507 = vmatmul.mubr.f32.gmra.mxu0 %v425
      %v508 = vpop.f32.mrf.mxu0
      %v509 = vadd.f32 %v412, %v508
      %v510 = vpop.f32.mrf.mxu0
      %511 = vdwg.mxu0
      %s512 = scalar_lea.vmem %s2, 64
      %v513 = vld [vmem:[%s512] sm:$0xff]
      %v514 = vld [vmem:[%s512 + $0x8] sm:$0xff]
      %v515 = vld [vmem:[%s512 + $0x10] sm:$0xff]
      %v516 = vld [vmem:[%s512 + $0x18] sm:$0xff]
      %v518 = vsel %vm317, %v513, 0
      %v521 = vsel %vm317, %v514, 0
      %v524 = vsel %vm317, %v515, 0
      %v527 = vsel %vm317, %v516, 0
      %529 = vmatprep.subr.mxu0 0.0
      %530 = vmatpush1.msra.mxu0 0.0
      %531 = vmatprep.subr.mxu0 0.0
      %532 = vmatpush1.msra.mxu0 0.0
      %533 = vmatprep.subr.mxu0 0.0
      %534 = vmatpush1.msra.mxu0 0.0
      %535 = vmatprep.subr.mxu0 0.0
      %536 = vmatpush1.msra.mxu0 0.0
      %537 = vmatprep.subr.mxu0 0.0
      %538 = vmatpush1.msra.mxu0 0.0
      %539 = vmatprep.subr.mxu0 0.0
      %540 = vmatpush1.msra.mxu0 0.0
      %541 = vmatprep.subr.mxu0 0.0
      %542 = vmatpush1.msra.mxu0 0.0
      %543 = vmatprep.subr.mxu0 0.0
      %544 = vmatpush1.msra.mxu0 0.0
      %545 = vmatprep.subr.mxu0 0.0
      %546 = vmatpush1.msra.mxu0 0.0
      %547 = vmatprep.subr.mxu0 0.0
      %548 = vmatpush1.msra.mxu0 0.0
      %549 = vmatprep.subr.mxu0 0.0
      %550 = vmatpush1.msra.mxu0 0.0
      %551 = vmatprep.subr.mxu0 0.0
      %552 = vmatpush1.msra.mxu0 0.0
      %553 = vmatprep.subr.mxu0 0.0
      %554 = vmatpush1.msra.mxu0 0.0
      %555 = vmatprep.subr.mxu0 0.0
      %556 = vmatpush1.msra.mxu0 0.0
      %557 = vmatprep.subr.mxu0 0.0
      %558 = vmatpush1.msra.mxu0 %v298
      %559 = vmatprep.subr.mxu0 0.0
      %560 = vmatpush1.msra.mxu0 %v292
      %561 = vmatprep.subr.mxu0 0.0
      %562 = vmatpush2.msra.mxu0 0.0
      %563 = vmatprep.subr.mxu0 0.0
      %564 = vmatpush2.msra.mxu0 0.0
      %565 = vmatprep.subr.mxu0 0.0
      %566 = vmatpush2.msra.mxu0 0.0
      %567 = vmatprep.subr.mxu0 0.0
      %568 = vmatpush2.msra.mxu0 0.0
      %569 = vmatprep.subr.mxu0 0.0
      %570 = vmatpush2.msra.mxu0 0.0
      %571 = vmatprep.subr.mxu0 0.0
      %572 = vmatpush2.msra.mxu0 0.0
      %573 = vmatprep.subr.mxu0 0.0
      %574 = vmatpush2.msra.mxu0 0.0
      %575 = vmatprep.subr.mxu0 0.0
      %576 = vmatpush2.msra.mxu0 0.0
      %577 = vmatprep.subr.mxu0 0.0
      %578 = vmatpush2.msra.mxu0 0.0
      %579 = vmatprep.subr.mxu0 0.0
      %580 = vmatpush2.msra.mxu0 0.0
      %581 = vmatprep.subr.mxu0 0.0
      %582 = vmatpush2.msra.mxu0 0.0
      %583 = vmatprep.subr.mxu0 0.0
      %584 = vmatpush2.msra.mxu0 0.0
      %585 = vmatprep.subr.mxu0 0.0
      %586 = vmatpush2.msra.mxu0 0.0
      %587 = vmatprep.subr.mxu0 0.0
      %588 = vmatpush2.msra.mxu0 0.0
      %589 = vmatprep.subr.mxu0 0.0
      %590 = vmatpush2.msra.mxu0 0.0
      %591 = vmatprep.subr.mxu0 0.0
      %592 = vmatpush2.msra.mxu0 0.0
      %593 = vmatprep.mubr.f32.mxu0 0.0
      %594 = vmatmul.mubr.f32.gmra.mxu0 %v518
      %v595 = vpop.f32.mrf.mxu0
      %v596 = vadd.f32 0.0, %v595
      %v597 = vpop.f32.mrf.mxu0
      %598 = vmatprep.mubr.f32.mxu0 0.0
      %599 = vmatmul.mubr.f32.gmra.mxu0 %v521
      %v600 = vpop.f32.mrf.mxu0
      %v601 = vadd.f32 0.0, %v600
      %v602 = vpop.f32.mrf.mxu0
      %603 = vmatprep.mubr.f32.mxu0 0.0
      %604 = vmatmul.mubr.f32.gmra.mxu0 %v524
      %v605 = vpop.f32.mrf.mxu0
      %v606 = vadd.f32 0.0, %v605
      %v607 = vpop.f32.mrf.mxu0
      %608 = vmatprep.mubr.f32.mxu0 0.0
      %609 = vmatmul.mubr.f32.gmra.mxu0 %v527
      %v610 = vpop.f32.mrf.mxu0
      %v611 = vadd.f32 0.0, %v610
      %v612 = vpop.f32.mrf.mxu0
      %613 = vdwg.mxu0
      %v614 = vadd.f32 %v494, %v596
      %v615 = vadd.f32 %v499, %v601
      %v616 = vadd.f32 %v504, %v606
      %v617 = vadd.f32 %v509, %v611
      %v618 = vld [vmem:[%s3] sm:$0x1]
      %v620 = vlaneseq
      %v621 = vshrl.u32 %v620, 7
      %v622 = vsub.s32 0, %v621
      %v623 = vrot.slane %v618, %v622
      %v625 = vadd.f32 %v614, %v623
      %v626 = vadd.f32 %v615, %v623
      %v627 = vadd.f32 %v616, %v623
      %v628 = vadd.f32 %v617, %v623
      %629 = vst.msk [vmem:[%s197] sm:$0xff] %vm216, %v625
      %630 = vst.msk [vmem:[%s197 + $0x8] sm:$0xff] %vm216, %v626
      %631 = vst.msk [vmem:[%s197 + $0x10] sm:$0xff] %vm216, %v627
      %632 = vst.msk [vmem:[%s197 + $0x18] sm:$0xff] %vm216, %v628
      %p633 = scmp.lt.s32.totalorder %s15, 1
      %s634 = scalar_select %p633, %s15, 1
      %s635 = smul.addr %s634, 4
      %s636 = smul.addr %s635, 8
      %s637 = scalar_lea.vmem %s4, %s636
      // Predicated region
      $region37: #{forward.1} parent=35 // pred_check
        %p638 = pneg %p122
      $region38: #{forward.1} parent=35 // pred_check_branch
        %640 = sbr.rel (%p638) target = $region40
      $region39: #{forward.1} parent=35 // pred_region
        _
      $region40: #{forward.1} parent=35 // pred_fallthru
        _
    $region36: #{forward.1} parent=5 // pred_fallthru
      _
    %p641 = scmp.le.s32.totalorder 2, %s10
    // Predicated region
    $region41: #{forward.1} parent=5 // pred_check
      %p642 = pneg %p641
    $region42: #{forward.1} parent=5 // pred_check_branch
      %644 = sbr.rel (%p642) target = $region44
    $region43: #{forward.1} parent=5 // pred_region
      %s645 = ssub.s32 %s10, 2
      // Predicated region
      $region45: #{forward.1} parent=43 // pred_check
        %p646 = pneg %p128
      $region46: #{forward.1} parent=43 // pred_check_branch
        %648 = sbr.rel (%p646) target = $region48
      $region47: #{forward.1} parent=43 // pred_region
        %p649 = scmp.lt.s32.totalorder %s16, 1
        %s650 = scalar_select %p649, %s16, 1
        %s651 = smul.addr %s650, 4
        %s652 = smul.addr %s651, 8
        %s653 = scalar_lea.vmem %s4, %s652
      $region48: #{forward.1} parent=43 // pred_fallthru
        _
    $region44: #{forward.1} parent=5 // pred_fallthru
      _
  $region6: #{forward.1} parent=0 // loop_footer
    %s14 = sadd.s32 1, %s10
  $region7: #{forward.1} parent=0 // loop_footer_branch
    %9 = sbr.rel target = $region3
  $region8: #{forward.1} parent=0 // loop_exit
    _

</llo_original>
